<compile_context>
chip_gen: v7x
topology: tpu7x:2x2x1
jax: 0.10.0
libtpu: 0.0.40
codegen_flags: <defaults>
</compile_context>

<pallas_src>
import math

import jax
import jax.numpy as jnp
from jax.experimental import pallas as pl
from jax.experimental.pallas import tpu as pltpu

PI_TORCH = 3.14159265  # constant used verbatim by the PyTorch module

# Chebyshev polynomials: cos(m*theta) expressed in cos(theta) == mlambda[m] in the module.
_MLAMBDA = {
    0: lambda x: x ** 0,
    1: lambda x: x,
    2: lambda x: 2.0 * x ** 2 - 1.0,
    3: lambda x: 4.0 * x ** 3 - 3.0 * x,
    4: lambda x: 8.0 * x ** 4 - 8.0 * x ** 2 + 1.0,
    5: lambda x: 16.0 * x ** 5 - 20.0 * x ** 3 + 5.0 * x,
}


def _make_sphereface_kernel(m: int, lamb: float, tile_c: int):
    """Kernel body with margin m, lambda and the class-tile width baked in."""
    # k = floor(m * acos(cos) / PI) via threshold counting (acos is decreasing:
    # theta >= j*PI/m  <=>  cos_theta <= cos(j*PI/m)).  Avoids acos in-kernel.
    # TODO(synk): exact ties at a bin boundary may differ from acos+floor by one bin.
    thresholds = [math.cos(j * PI_TORCH / m) for j in range(1, m + 1)] if m > 0 else []
    inv_one_plus_lamb = 1.0 / (1.0 + lamb)

    def kernel(x_ref, w_ref, winv_ref, xinv_ref, xnorm_ref, t_ref, o_ref):
        j = pl.program_id(1)                       # class-tile index (innermost axis)

        # Raw matmul on the MXU in the streaming dtype (bf16 by default), f32 accumulate.
        s = jax.lax.dot_general(
            x_ref[...], w_ref[...],
            dimension_numbers=(((1,), (1,)), ((), ())),
            preferred_element_type=jnp.float32)                  # (TB, TC)

        inv_w = winv_ref[...]                      # (1, TC)  f32, precomputed 1/||w||
        inv_x = xinv_ref[...]                      # (TB, 1)  f32, precomputed 1/||x||
        x_norm = xnorm_ref[...]                    # (TB, 1)  f32, precomputed ||x||
        t = t_ref[...]                             # (TB, 1)  int32 targets

        # y = ||x|| * cos_theta (only the weight norm removed).  The main term
        # clip(cos,-1,1) * ||x||  ==  clip(y, -||x||, +||x||): saves two full-tile muls.
        y = s * inv_w                                            # (TB, TC)
        main = jnp.minimum(jnp.maximum(y, -x_norm), x_norm)

        # Global class ids of this tile -> one-hot mask against the per-row target.
        class_ids = j * tile_c + jax.lax.broadcasted_iota(jnp.int32, y.shape, 1)
        is_target = class_ids == t                               # (TB, TC)

        # Margin math only on the gathered target value (TB scalars, not TB*TC).
        # If the target class is not in this class tile the mask is all-zero, so the
        # correction term vanishes automatically -- no extra guard needed.
        y_t = jnp.sum(jnp.where(is_target, y, 0.0), axis=1, keepdims=True)       # (TB,1)
        cos_t = jnp.clip(y_t * inv_x, -1.0, 1.0)
        cos_m_t = _MLAMBDA[m](cos_t)
        k = jnp.zeros_like(cos_t)
        sign = jnp.ones_like(cos_t)                # fused k and (-1)**k accumulation
        for thr in thresholds:
            hit = cos_t <= jnp.float32(thr)
            k = k + jnp.where(hit, 1.0, 0.0)
            sign = jnp.where(hit, -sign, sign)
        phi_t = sign * cos_m_t - 2.0 * k
        corr = (phi_t - cos_t) * jnp.float32(inv_one_plus_lamb) * x_norm         # (TB,1)

        o_ref[...] = (main + jnp.where(is_target, corr, 0.0)).astype(o_ref.dtype)

    return kernel


def _round_up(n: int, mult: int) -> int:
    return ((n + mult - 1) // mult) * mult


def _fit_tiles(B, C, D, stream_bytes, out_bytes, tile_b_max, tile_c_max, budget_bytes):
    """Pick (8,128)-aligned tiles as large as allowed while the double-buffered
    working set stays under the VMEM budget (v7x-safe)."""
    tile_b = min(_round_up(B, 8), tile_b_max)
    tile_c = min(_round_up(C, 128), tile_c_max)

    def est(tb, tc):
        # double-buffered x / w / out tiles + the tiny f32 side inputs
        return 2 * (tb * D * stream_bytes + tc * D * stream_bytes
                    + tb * tc * out_bytes + tc * 4 + 3 * tb * 4)

    while est(tile_b, tile_c) > budget_bytes and tile_c > 128:
        tile_c = max(128, _round_up(tile_c // 2, 128))
    while est(tile_b, tile_c) > budget_bytes and tile_b > 8:
        tile_b = max(8, _round_up(tile_b // 2, 8))
    return tile_b, tile_c, est(tile_b, tile_c)


def sphereface_forward(x, weight, target, *, m: int = 4, iter_count: int = 1,
                       mxu_dtype=jnp.bfloat16, out_dtype=jnp.float32,
                       tile_b_max: int = 512, tile_c_max: int = 1024,
                       vmem_budget_bytes: int = 40 * 1024 * 1024,
                       weight_buffers: int | None = None):
    """Pallas wrapper reproducing Sphereface.forward.

    Notes:
      * PyTorch increments self.iter before computing lamb; pass the already-incremented
        value as iter_count.
      * mxu_dtype=jnp.bfloat16 (default) streams x/weight in bf16 through the MXU with an
        f32 accumulator; norms and the margin math stay f32.  Use jnp.float32 for exact
        f32 semantics.
      * On v5e (lowest HBM BW) consider out_dtype=jnp.bfloat16 to halve the BxC writeback
        if the downstream loss tolerates it.
      * weight_buffers (e.g. 3) deepens the weight-stream pipeline via pl.Buffered when the
        per-tile compute is short (small D); worth sweeping, off by default.
    """
    lamb = max(5.0, 1000.0 * (1.0 + 0.12 * iter_count) ** (-1.0))
    B, D = x.shape
    C, D2 = weight.shape
    assert D == D2

    stream_bytes = jnp.dtype(mxu_dtype).itemsize
    out_bytes = jnp.dtype(out_dtype).itemsize
    tile_b, tile_c, vmem_est = _fit_tiles(B, C, D, stream_bytes, out_bytes,
                                          tile_b_max, tile_c_max, vmem_budget_bytes)
    Bp = _round_up(B, tile_b)
    Cp = _round_up(C, tile_c)

    xp = x if Bp == B else jnp.pad(x, ((0, Bp - B), (0, 0)))
    wp = weight if Cp == C else jnp.pad(weight, ((0, Cp - C), (0, 0)))
    tp = target.astype(jnp.int32)
    if Bp != B:
        tp = jnp.pad(tp, (0, Bp - B))
    tp = tp.reshape(Bp, 1)

    # Precompute all norm-dependent scalars ONCE (f32, from the original inputs) so the
    # kernel never re-reduces them per class tile:
    #   1/||w|| lane-dense (1, Cp);  1/max(||x||,1e-12) and ||x|| as (Bp, 1).
    xf = xp.astype(jnp.float32)
    ss_x = jnp.sum(xf * xf, axis=1, keepdims=True)
    x_inv = jax.lax.rsqrt(jnp.maximum(ss_x, 1e-24))              # == 1/max(||x||, 1e-12)
    x_norm = jnp.sqrt(ss_x)                                      # NormOfFeature (no eps)
    # NOTE: padded batch rows get x_inv ~ 1e12; harmless because x is zero-padded and the
    # rows are sliced off, but keep the padding zero.
    wf = wp.astype(jnp.float32)
    w_inv = jax.lax.rsqrt(jnp.maximum(jnp.sum(wf * wf, axis=1), 1e-24)).reshape(1, Cp)

    # Streams for the MXU (bf16 by default).
    xs = xp.astype(mxu_dtype)
    ws = wp.astype(mxu_dtype)

    kernel = _make_sphereface_kernel(m, lamb, tile_c)
    grid_b, grid_c = Bp // tile_b, Cp // tile_c

    w_spec_kwargs = {}
    if weight_buffers is not None and weight_buffers > 2:
        w_spec_kwargs["pipeline_mode"] = pl.Buffered(weight_buffers)

    out = pl.pallas_call(
        kernel,
        out_shape=jax.ShapeDtypeStruct((Bp, Cp), out_dtype),
        grid_spec=pltpu.PrefetchScalarGridSpec(
            num_scalar_prefetch=0,
            grid=(grid_b, grid_c),          # j (classes) innermost: x DMA'd once per i
            in_specs=[
                pl.BlockSpec((tile_b, D), lambda i, j: (i, 0)),   # x tile (stream dtype)
                pl.BlockSpec((tile_c, D), lambda i, j: (j, 0),    # weight tile
                             **w_spec_kwargs),
                pl.BlockSpec((1, tile_c), lambda i, j: (0, j)),   # 1/||w|| tile
                pl.BlockSpec((tile_b, 1), lambda i, j: (i, 0)),   # 1/||x||
                pl.BlockSpec((tile_b, 1), lambda i, j: (i, 0)),   # ||x||
                pl.BlockSpec((tile_b, 1), lambda i, j: (i, 0)),   # target ids
            ],
            out_specs=pl.BlockSpec((tile_b, tile_c), lambda i, j: (i, j)),
        ),
        compiler_params=pltpu.CompilerParams(
            dimension_semantics=("parallel", "parallel"),
            vmem_limit_bytes=int(min(max(vmem_est + (8 << 20), 32 << 20), 48 << 20)),
        ),
        cost_estimate=pl.CostEstimate(
            flops=2 * Bp * Cp * D,
            transcendentals=0,
            bytes_accessed=(stream_bytes * (Bp * D + grid_b * Cp * D)
                            + out_bytes * Bp * Cp
                            + 4 * (Cp + 3 * Bp)),
        ),
    )(xs, ws, w_inv, x_inv, x_norm, tp)

    if Bp != B or Cp != C:
        out = out[:B, :C]
    return out


def _reference_forward(x, weight, target, *, m: int = 4, iter_count: int = 1,
                       mxu_dtype=jnp.float32):
    """Plain-JAX reference.  With mxu_dtype=float32 it mirrors the PyTorch module
    literally; with bfloat16 it mirrors the kernel's mixed-precision matmul."""
    lamb = max(5.0, 1000.0 * (1.0 + 0.12 * iter_count) ** (-1.0))
    x32 = x.astype(jnp.float32)
    w32 = weight.astype(jnp.float32)
    x_n = jnp.maximum(jnp.linalg.norm(x32, axis=1, keepdims=True), 1e-12)
    w_n = jnp.maximum(jnp.linalg.norm(w32, axis=1, keepdims=True), 1e-12)
    s = jnp.dot(x.astype(mxu_dtype), weight.astype(mxu_dtype).T,
                preferred_element_type=jnp.float32)
    cos_theta = jnp.clip(s / x_n / w_n.T, -1.0, 1.0)
    cos_m_theta = _MLAMBDA[m](cos_theta)
    theta = jnp.arccos(cos_theta)
    k = jnp.floor(m * theta / PI_TORCH)
    phi_theta = (-1.0) ** k * cos_m_theta - 2.0 * k
    one_hot = jax.nn.one_hot(target, cos_theta.shape[1], dtype=jnp.float32)
    out = one_hot * (phi_theta - cos_theta) / (1.0 + lamb) + cos_theta
    return out * jnp.linalg.norm(x32, axis=1, keepdims=True)


if __name__ == "__main__":
    key = jax.random.PRNGKey(0)

    # --- Test 1: exact f32 path, module-consistent small shapes (single tile). ---
    B, IN_FEATS, CLASSNUM, MARGIN = 8, 32, 16, 4
    kx, kw, kt, key = jax.random.split(key, 4)
    x = jax.random.normal(kx, (B, IN_FEATS), dtype=jnp.float32)
    bound = math.sqrt(6.0 / (IN_FEATS + CLASSNUM))        # deterministic xavier_uniform_
    weight = jax.random.uniform(kw, (CLASSNUM, IN_FEATS),
                                minval=-bound, maxval=bound, dtype=jnp.float32)
    target = jax.random.randint(kt, (B,), 0, CLASSNUM, dtype=jnp.int32)

    out = jax.block_until_ready(
        sphereface_forward(x, weight, target, m=MARGIN, iter_count=1,
                           mxu_dtype=jnp.float32))
    ref = _reference_forward(x, weight, target, m=MARGIN, iter_count=1)
    assert out.shape == (B, CLASSNUM)
    assert jnp.allclose(out, ref, atol=1e-4, rtol=1e-4), "mismatch vs f32 reference (test 1)"

    # --- Test 2: default bf16-stream path, multi-tile grid (2 batch x 3 class tiles)
    #     with class padding; compared against a matching mixed-precision reference. ---
    B2, D2, C2 = 16, 64, 300
    kx2, kw2, kt2, key = jax.random.split(key, 4)
    x2 = jax.random.normal(kx2, (B2, D2), dtype=jnp.float32)
    bound2 = math.sqrt(6.0 / (D2 + C2))
    w2 = jax.random.uniform(kw2, (C2, D2), minval=-bound2, maxval=bound2, dtype=jnp.float32)
    t2 = jax.random.randint(kt2, (B2,), 0, C2, dtype=jnp.int32)

    out2 = jax.block_until_ready(
        sphereface_forward(x2, w2, t2, m=MARGIN, iter_count=3,
                           tile_b_max=8, tile_c_max=128))
    ref2 = _reference_forward(x2, w2, t2, m=MARGIN, iter_count=3,
                              mxu_dtype=jnp.bfloat16)
    assert out2.shape == (B2, C2)
    assert jnp.allclose(out2, ref2, atol=5e-3, rtol=5e-3), \
        "mismatch vs mixed-precision reference (test 2)"

    print("KERNEL_OK")
</pallas_src>

<mosaic_0001>
module attributes {stable_mosaic.version = 11 : i64} {
  func.func @kernel(%arg0: i32, %arg1: i32, %arg2: memref<8x32xf32, #tpu.memory_space<vmem>>, %arg3: memref<128x32xf32, #tpu.memory_space<vmem>>, %arg4: memref<1x128xf32, #tpu.memory_space<vmem>>, %arg5: memref<8x1xf32, #tpu.memory_space<vmem>>, %arg6: memref<8x1xf32, #tpu.memory_space<vmem>>, %arg7: memref<8x1xi32, #tpu.memory_space<vmem>>, %arg8: memref<8x128xf32, #tpu.memory_space<vmem>>) attributes {dimension_semantics = [#tpu.dimension_semantics<parallel>, #tpu.dimension_semantics<parallel>], iteration_bounds = array<i64: 1, 1>, scalar_prefetch = 0 : i64, scratch_operands = 0 : i64, tpu.core_type = #tpu.core_type<tc>, window_params = [{transform_indices = @transform_0, window_bounds = array<i64: 8, 32>}, {transform_indices = @transform_1, window_bounds = array<i64: 128, 32>}, {transform_indices = @transform_2, window_bounds = array<i64: 1, 128>}, {transform_indices = @transform_3, window_bounds = array<i64: 8, 1>}, {transform_indices = @transform_4, window_bounds = array<i64: 8, 1>}, {transform_indices = @transform_5, window_bounds = array<i64: 8, 1>}, {transform_indices = @transform_6, window_bounds = array<i64: 8, 128>}]} {
    %c0 = arith.constant 0 : index
    %c0_0 = arith.constant 0 : index
    %0 = vector.load %arg2[%c0, %c0_0] : memref<8x32xf32, #tpu.memory_space<vmem>>, vector<8x32xf32>
    %c0_1 = arith.constant 0 : index
    %c0_2 = arith.constant 0 : index
    %1 = vector.load %arg3[%c0_1, %c0_2] : memref<128x32xf32, #tpu.memory_space<vmem>>, vector<128x32xf32>
    %cst = arith.constant dense<0.000000e+00> : vector<8x128xf32>
    %2 = tpu.matmul %0, %1, %cst {dimension_numbers = #tpu.dot_dimension_numbers<[1], [1], [0], [0], [0, 0, 1, 0], [], []>} : vector<8x32xf32>, vector<128x32xf32>, vector<8x128xf32> -> vector<8x128xf32>
    %c0_3 = arith.constant 0 : index
    %c0_4 = arith.constant 0 : index
    %3 = vector.load %arg4[%c0_3, %c0_4] : memref<1x128xf32, #tpu.memory_space<vmem>>, vector<1x128xf32>
    %c0_5 = arith.constant 0 : index
    %c0_6 = arith.constant 0 : index
    %4 = vector.load %arg5[%c0_5, %c0_6] : memref<8x1xf32, #tpu.memory_space<vmem>>, vector<8x1xf32>
    %c0_7 = arith.constant 0 : index
    %c0_8 = arith.constant 0 : index
    %5 = vector.load %arg6[%c0_7, %c0_8] : memref<8x1xf32, #tpu.memory_space<vmem>>, vector<8x1xf32>
    %c0_9 = arith.constant 0 : index
    %c0_10 = arith.constant 0 : index
    %6 = vector.load %arg7[%c0_9, %c0_10] : memref<8x1xi32, #tpu.memory_space<vmem>>, vector<8x1xi32>
    %7 = vector.broadcast %3 : vector<1x128xf32> to vector<8x128xf32>
    %8 = arith.mulf %2, %7 : vector<8x128xf32>
    %cst_11 = arith.constant 0.000000e+00 : f32
    %9 = vector.broadcast %cst_11 : f32 to vector<8x1xf32>
    %10 = arith.subf %9, %5 : vector<8x1xf32>
    %11 = vector.broadcast %10 : vector<8x1xf32> to vector<8x128xf32>
    %12 = arith.maximumf %8, %11 : vector<8x128xf32>
    %13 = vector.broadcast %5 : vector<8x1xf32> to vector<8x128xf32>
    %14 = arith.minimumf %12, %13 : vector<8x128xf32>
    %c128_i32 = arith.constant 128 : i32
    %15 = arith.muli %arg1, %c128_i32 : i32
    %16 = tpu.iota {dimensions = array<i32: 1>} : vector<8x128xi32>
    %17 = vector.broadcast %15 : i32 to vector<8x128xi32>
    %18 = arith.addi %17, %16 : vector<8x128xi32>
    %19 = vector.broadcast %6 : vector<8x1xi32> to vector<8x128xi32>
    %20 = arith.cmpi eq, %18, %19 : vector<8x128xi32>
    %cst_12 = arith.constant 0.000000e+00 : f32
    %21 = vector.broadcast %cst_12 : f32 to vector<8x128xf32>
    %22 = arith.select %20, %8, %21 : vector<8x128xi1>, vector<8x128xf32>
    %cst_13 = arith.constant dense<0.000000e+00> : vector<8xf32>
    %23 = vector.multi_reduction <add>, %22, %cst_13 [1] : vector<8x128xf32> to vector<8xf32>
    %24 = vector.shape_cast %23 : vector<8xf32> to vector<8x1xf32>
    %25 = arith.mulf %24, %4 : vector<8x1xf32>
    %cst_14 = arith.constant -1.000000e+00 : f32
    %cst_15 = arith.constant 1.000000e+00 : f32
    %26 = vector.broadcast %cst_14 : f32 to vector<8x1xf32>
    %27 = arith.maximumf %26, %25 : vector<8x1xf32>
    %28 = vector.broadcast %cst_15 : f32 to vector<8x1xf32>
    %29 = arith.minimumf %28, %27 : vector<8x1xf32>
    %30 = arith.mulf %29, %29 : vector<8x1xf32>
    %31 = arith.mulf %30, %30 : vector<8x1xf32>
    %cst_16 = arith.constant 8.000000e+00 : f32
    %32 = vector.broadcast %cst_16 : f32 to vector<8x1xf32>
    %33 = arith.mulf %32, %31 : vector<8x1xf32>
    %34 = arith.mulf %29, %29 : vector<8x1xf32>
    %cst_17 = arith.constant 8.000000e+00 : f32
    %35 = vector.broadcast %cst_17 : f32 to vector<8x1xf32>
    %36 = arith.mulf %35, %34 : vector<8x1xf32>
    %37 = arith.subf %33, %36 : vector<8x1xf32>
    %cst_18 = arith.constant 1.000000e+00 : f32
    %38 = vector.broadcast %cst_18 : f32 to vector<8x1xf32>
    %39 = arith.addf %37, %38 : vector<8x1xf32>
    %cst_19 = arith.constant 0.000000e+00 : f32
    %40 = vector.broadcast %cst_19 : f32 to vector<8x1xf32>
    %cst_20 = arith.constant 1.000000e+00 : f32
    %41 = vector.broadcast %cst_20 : f32 to vector<8x1xf32>
    %cst_21 = arith.constant 0.707106769 : f32
    %42 = vector.broadcast %cst_21 : f32 to vector<8x1xf32>
    %43 = arith.cmpf ole, %29, %42 : vector<8x1xf32>
    %cst_22 = arith.constant 1.000000e+00 : f32
    %cst_23 = arith.constant 0.000000e+00 : f32
    %44 = vector.broadcast %cst_22 : f32 to vector<8x1xf32>
    %45 = vector.broadcast %cst_23 : f32 to vector<8x1xf32>
    %46 = arith.select %43, %44, %45 : vector<8x1xi1>, vector<8x1xf32>
    %47 = arith.addf %40, %46 : vector<8x1xf32>
    %cst_24 = arith.constant 0.000000e+00 : f32
    %48 = vector.broadcast %cst_24 : f32 to vector<8x1xf32>
    %49 = arith.subf %48, %41 : vector<8x1xf32>
    %50 = arith.select %43, %49, %41 : vector<8x1xi1>, vector<8x1xf32>
    %cst_25 = arith.constant 1.79489656E-9 : f32
    %51 = vector.broadcast %cst_25 : f32 to vector<8x1xf32>
    %52 = arith.cmpf ole, %29, %51 : vector<8x1xf32>
    %cst_26 = arith.constant 1.000000e+00 : f32
    %cst_27 = arith.constant 0.000000e+00 : f32
    %53 = vector.broadcast %cst_26 : f32 to vector<8x1xf32>
    %54 = vector.broadcast %cst_27 : f32 to vector<8x1xf32>
    %55 = arith.select %52, %53, %54 : vector<8x1xi1>, vector<8x1xf32>
    %56 = arith.addf %47, %55 : vector<8x1xf32>
    %cst_28 = arith.constant 0.000000e+00 : f32
    %57 = vector.broadcast %cst_28 : f32 to vector<8x1xf32>
    %58 = arith.subf %57, %50 : vector<8x1xf32>
    %59 = arith.select %52, %58, %50 : vector<8x1xi1>, vector<8x1xf32>
    %cst_29 = arith.constant -0.707106769 : f32
    %60 = vector.broadcast %cst_29 : f32 to vector<8x1xf32>
    %61 = arith.cmpf ole, %29, %60 : vector<8x1xf32>
    %cst_30 = arith.constant 1.000000e+00 : f32
    %cst_31 = arith.constant 0.000000e+00 : f32
    %62 = vector.broadcast %cst_30 : f32 to vector<8x1xf32>
    %63 = vector.broadcast %cst_31 : f32 to vector<8x1xf32>
    %64 = arith.select %61, %62, %63 : vector<8x1xi1>, vector<8x1xf32>
    %65 = arith.addf %56, %64 : vector<8x1xf32>
    %cst_32 = arith.constant 0.000000e+00 : f32
    %66 = vector.broadcast %cst_32 : f32 to vector<8x1xf32>
    %67 = arith.subf %66, %59 : vector<8x1xf32>
    %68 = arith.select %61, %67, %59 : vector<8x1xi1>, vector<8x1xf32>
    %cst_33 = arith.constant -1.000000e+00 : f32
    %69 = vector.broadcast %cst_33 : f32 to vector<8x1xf32>
    %70 = arith.cmpf ole, %29, %69 : vector<8x1xf32>
    %cst_34 = arith.constant 1.000000e+00 : f32
    %cst_35 = arith.constant 0.000000e+00 : f32
    %71 = vector.broadcast %cst_34 : f32 to vector<8x1xf32>
    %72 = vector.broadcast %cst_35 : f32 to vector<8x1xf32>
    %73 = arith.select %70, %71, %72 : vector<8x1xi1>, vector<8x1xf32>
    %74 = arith.addf %65, %73 : vector<8x1xf32>
    %cst_36 = arith.constant 0.000000e+00 : f32
    %75 = vector.broadcast %cst_36 : f32 to vector<8x1xf32>
    %76 = arith.subf %75, %68 : vector<8x1xf32>
    %77 = arith.select %70, %76, %68 : vector<8x1xi1>, vector<8x1xf32>
    %78 = arith.mulf %77, %39 : vector<8x1xf32>
    %cst_37 = arith.constant 2.000000e+00 : f32
    %79 = vector.broadcast %cst_37 : f32 to vector<8x1xf32>
    %80 = arith.mulf %79, %74 : vector<8x1xf32>
    %81 = arith.subf %78, %80 : vector<8x1xf32>
    %82 = arith.subf %81, %29 : vector<8x1xf32>
    %cst_38 = arith.constant 0.00111874705 : f32
    %83 = vector.broadcast %cst_38 : f32 to vector<8x1xf32>
    %84 = arith.mulf %82, %83 : vector<8x1xf32>
    %85 = arith.mulf %84, %5 : vector<8x1xf32>
    %cst_39 = arith.constant 0.000000e+00 : f32
    %86 = vector.shape_cast %85 : vector<8x1xf32> to vector<8x1xf32>
    %87 = vector.broadcast %86 : vector<8x1xf32> to vector<8x128xf32>
    %88 = vector.broadcast %cst_39 : f32 to vector<8x128xf32>
    %89 = arith.select %20, %87, %88 : vector<8x128xi1>, vector<8x128xf32>
    %90 = arith.addf %14, %89 : vector<8x128xf32>
    %c0_40 = arith.constant 0 : index
    %c0_41 = arith.constant 0 : index
    %91 = vector.load %arg8[%c0_40, %c0_41] : memref<8x128xf32, #tpu.memory_space<vmem>>, vector<8x128xf32>
    tpu.vector_store %arg8[%c0_40, %c0_41], %90 {strides = array<i32>} : memref<8x128xf32, #tpu.memory_space<vmem>>, vector<8x128xf32>,
    return
  }
  func.func @transform_0(%arg0: i32, %arg1: i32) -> (i32, i32) {
    %c0_i32 = arith.constant 0 : i32
    %c0_i32_0 = arith.constant 0 : i32
    return %arg0, %c0_i32 : i32, i32
  }
  func.func @transform_1(%arg0: i32, %arg1: i32) -> (i32, i32) {
    %c0_i32 = arith.constant 0 : i32
    %c0_i32_0 = arith.constant 0 : i32
    return %arg1, %c0_i32 : i32, i32
  }
  func.func @transform_2(%arg0: i32, %arg1: i32) -> (i32, i32) {
    %c0_i32 = arith.constant 0 : i32
    %c0_i32_0 = arith.constant 0 : i32
    return %c0_i32, %arg1 : i32, i32
  }
  func.func @transform_3(%arg0: i32, %arg1: i32) -> (i32, i32) {
    %c0_i32 = arith.constant 0 : i32
    %c0_i32_0 = arith.constant 0 : i32
    return %arg0, %c0_i32 : i32, i32
  }
  func.func @transform_4(%arg0: i32, %arg1: i32) -> (i32, i32) {
    %c0_i32 = arith.constant 0 : i32
    %c0_i32_0 = arith.constant 0 : i32
    return %arg0, %c0_i32 : i32, i32
  }
  func.func @transform_5(%arg0: i32, %arg1: i32) -> (i32, i32) {
    %c0_i32 = arith.constant 0 : i32
    %c0_i32_0 = arith.constant 0 : i32
    return %arg0, %c0_i32 : i32, i32
  }
  func.func @transform_6(%arg0: i32, %arg1: i32) -> (i32, i32) {
    %c0_i32 = arith.constant 0 : i32
    return %arg0, %arg1 : i32, i32
  }
}

</mosaic_0001>

<llo_original>
// kernel: tpu_custom_call.1
$region0: #{tpu_custom_call.1}
  #allocation0 [shape = 'u32[]', space=smem, size = 0x4, offset = 0x4, fixed_abs, tag = 'smem constant byte address 0x4 - core index']
  #allocation1 [shape = 'u32[144,128]{1,0:T(1,128)}', space=vmem, size = 0x12000, scoped, tag = 'internal scratch']
  %s0 = inlined_call_operand.vmem [shape: f32[8,32], index: 0, kind: input, shape index: {}]
  %s1 = inlined_call_operand.vmem [shape: f32[128,32], index: 1, kind: input, shape index: {}]
  %s2 = inlined_call_operand.vmem [shape: f32[1,128], index: 2, kind: input, shape index: {}]
  %s3 = inlined_call_operand.vmem [shape: f32[8,1], index: 3, kind: input, shape index: {}]
  %s4 = inlined_call_operand.vmem [shape: f32[8,1], index: 4, kind: input, shape index: {}]
  %s5 = inlined_call_operand.vmem [shape: s32[8,1], index: 5, kind: input, shape index: {}]
  %s6 = inlined_call_operand.hbm [shape: f32[8,128], index: 6, kind: output, shape index: {}]
  %s7 = sld [smem:[#allocation0]]
  $region34: #{tpu_custom_call.1} parent=0
    _
  %s9 = ssub.s32 1, %s7
  %s10 = scalar_select 0, %s9, %s7
  $region1: #{tpu_custom_call.1} parent=0
    #allocation2 [shape = 'u8[4096]{0}', space=vmem, size = 0x1000, scoped, tag = 'output window, operand 0, single buffered']
    #allocation3 [shape = 's32[1]{0}', space=sflag, size = 0x4, scoped, tag = 'scoped memory for tpu_custom_call.1']
    %11 = vsyncpa [#allocation3], 0
    // Predicated region
    $region2: #{tpu_custom_call.1} parent=1 // pred_check
      _
    $region3: #{tpu_custom_call.1} parent=1 // pred_check_branch
      %13 = sbr.rel (0) target = $region5
    $region4: #{tpu_custom_call.1} parent=1 // pred_region
      _
    $region5: #{tpu_custom_call.1} parent=1 // pred_fallthru
      _
    // Predicated region
    $region6: #{tpu_custom_call.1} parent=1 // pred_check
      _
    $region7: #{tpu_custom_call.1} parent=1 // pred_check_branch
      %15 = sbr.rel (0) target = $region9
    $region8: #{tpu_custom_call.1} parent=1 // pred_region
      _
    $region9: #{tpu_custom_call.1} parent=1 // pred_fallthru
      _
    // Predicated region
    $region10: #{tpu_custom_call.1} parent=1 // pred_check
      _
    $region11: #{tpu_custom_call.1} parent=1 // pred_check_branch
      %17 = sbr.rel (0) target = $region13
    $region12: #{tpu_custom_call.1} parent=1 // pred_region
      _
    $region13: #{tpu_custom_call.1} parent=1 // pred_fallthru
      _
    // Predicated region
    $region14: #{tpu_custom_call.1} parent=1 // pred_check
      _
    $region15: #{tpu_custom_call.1} parent=1 // pred_check_branch
      %19 = sbr.rel (0) target = $region17
    $region16: #{tpu_custom_call.1} parent=1 // pred_region
      _
    $region17: #{tpu_custom_call.1} parent=1 // pred_fallthru
      _
    // Predicated region
    $region18: #{tpu_custom_call.1} parent=1 // pred_check
      _
    $region19: #{tpu_custom_call.1} parent=1 // pred_check_branch
      %21 = sbr.rel (0) target = $region21
    $region20: #{tpu_custom_call.1} parent=1 // pred_region
      _
    $region21: #{tpu_custom_call.1} parent=1 // pred_fallthru
      _
    // Predicated region
    $region22: #{tpu_custom_call.1} parent=1 // pred_check
      _
    $region23: #{tpu_custom_call.1} parent=1 // pred_check_branch
      %23 = sbr.rel (0) target = $region25
    $region24: #{tpu_custom_call.1} parent=1 // pred_region
      _
    $region25: #{tpu_custom_call.1} parent=1 // pred_fallthru
      _
    %v24 = vld [vmem:[%s0] sm:$0xff]
    %v25 = vld [vmem:[%s1] sm:$0xff]
    %v26 = vld [vmem:[%s1 + $0x8] sm:$0xff]
    %v27 = vld [vmem:[%s1 + $0x10] sm:$0xff]
    %v28 = vld [vmem:[%s1 + $0x18] sm:$0xff]
    %v29 = vld [vmem:[%s1 + $0x20] sm:$0xff]
    %v30 = vld [vmem:[%s1 + $0x28] sm:$0xff]
    %v31 = vld [vmem:[%s1 + $0x30] sm:$0xff]
    %v32 = vld [vmem:[%s1 + $0x38] sm:$0xff]
    %v33 = vld [vmem:[%s1 + $0x40] sm:$0xff]
    %v34 = vld [vmem:[%s1 + $0x48] sm:$0xff]
    %v35 = vld [vmem:[%s1 + $0x50] sm:$0xff]
    %v36 = vld [vmem:[%s1 + $0x58] sm:$0xff]
    %v37 = vld [vmem:[%s1 + $0x60] sm:$0xff]
    %v38 = vld [vmem:[%s1 + $0x68] sm:$0xff]
    %v39 = vld [vmem:[%s1 + $0x70] sm:$0xff]
    %v40 = vld [vmem:[%s1 + $0x78] sm:$0xff]
    %vm41 = vcmask 261120
    %v43 = vsel %vm41, %v24, 0
    %v46 = vsel %vm41, %v25, 0
    %v49 = vsel %vm41, %v26, 0
    %v52 = vsel %vm41, %v27, 0
    %v55 = vsel %vm41, %v28, 0
    %v58 = vsel %vm41, %v29, 0
    %v61 = vsel %vm41, %v30, 0
    %v64 = vsel %vm41, %v31, 0
    %v67 = vsel %vm41, %v32, 0
    %v70 = vsel %vm41, %v33, 0
    %v73 = vsel %vm41, %v34, 0
    %v76 = vsel %vm41, %v35, 0
    %v79 = vsel %vm41, %v36, 0
    %v82 = vsel %vm41, %v37, 0
    %v85 = vsel %vm41, %v38, 0
    %v88 = vsel %vm41, %v39, 0
    %v91 = vsel %vm41, %v40, 0
    %93 = vmatprep.subr.mxu0 0.0
    %94 = vmatpush1.xpose.msra.mxu0 %v46
    %95 = vmatprep.subr.mxu0 0.0
    %96 = vmatpush1.xpose.msra.mxu0 %v49
    %97 = vmatprep.subr.mxu0 0.0
    %98 = vmatpush1.xpose.msra.mxu0 %v52
    %99 = vmatprep.subr.mxu0 0.0
    %100 = vmatpush1.xpose.msra.mxu0 %v55
    %101 = vmatprep.subr.mxu0 0.0
    %102 = vmatpush1.xpose.msra.mxu0 %v58
    %103 = vmatprep.subr.mxu0 0.0
    %104 = vmatpush1.xpose.msra.mxu0 %v61
    %105 = vmatprep.subr.mxu0 0.0
    %106 = vmatpush1.xpose.msra.mxu0 %v64
    %107 = vmatprep.subr.mxu0 0.0
    %108 = vmatpush1.xpose.msra.mxu0 %v67
    %109 = vmatprep.subr.mxu0 0.0
    %110 = vmatpush1.xpose.msra.mxu0 %v70
    %111 = vmatprep.subr.mxu0 0.0
    %112 = vmatpush1.xpose.msra.mxu0 %v73
    %113 = vmatprep.subr.mxu0 0.0
    %114 = vmatpush1.xpose.msra.mxu0 %v76
    %115 = vmatprep.subr.mxu0 0.0
    %116 = vmatpush1.xpose.msra.mxu0 %v79
    %117 = vmatprep.subr.mxu0 0.0
    %118 = vmatpush1.xpose.msra.mxu0 %v82
    %119 = vmatprep.subr.mxu0 0.0
    %120 = vmatpush1.xpose.msra.mxu0 %v85
    %121 = vmatprep.subr.mxu0 0.0
    %122 = vmatpush1.xpose.msra.mxu0 %v88
    %123 = vmatprep.subr.mxu0 0.0
    %124 = vmatpush1.xpose.msra.mxu0 %v91
    %125 = vmatprep.subr.mxu0 0.0
    %126 = vmatpush1.xpose.msra.mxu0 0.0
    %127 = vmatprep.subr.mxu0 0.0
    %128 = vmatpush1.xpose.msra.mxu0 0.0
    %129 = vmatprep.subr.mxu0 0.0
    %130 = vmatpush1.xpose.msra.mxu0 0.0
    %131 = vmatprep.subr.mxu0 0.0
    %132 = vmatpush1.xpose.msra.mxu0 0.0
    %133 = vmatprep.subr.mxu0 0.0
    %134 = vmatpush1.xpose.msra.mxu0 0.0
    %135 = vmatprep.subr.mxu0 0.0
    %136 = vmatpush1.xpose.msra.mxu0 0.0
    %137 = vmatprep.subr.mxu0 0.0
    %138 = vmatpush1.xpose.msra.mxu0 0.0
    %139 = vmatprep.subr.mxu0 0.0
    %140 = vmatpush1.xpose.msra.mxu0 0.0
    %141 = vmatprep.subr.mxu0 0.0
    %142 = vmatpush1.xpose.msra.mxu0 0.0
    %143 = vmatprep.subr.mxu0 0.0
    %144 = vmatpush1.xpose.msra.mxu0 0.0
    %145 = vmatprep.subr.mxu0 0.0
    %146 = vmatpush1.xpose.msra.mxu0 0.0
    %147 = vmatprep.subr.mxu0 0.0
    %148 = vmatpush1.xpose.msra.mxu0 0.0
    %149 = vmatprep.subr.mxu0 0.0
    %150 = vmatpush1.xpose.msra.mxu0 0.0
    %151 = vmatprep.subr.mxu0 0.0
    %152 = vmatpush1.xpose.msra.mxu0 0.0
    %153 = vmatprep.subr.mxu0 0.0
    %154 = vmatpush1.xpose.msra.mxu0 0.0
    %155 = vmatprep.subr.mxu0 0.0
    %156 = vmatpush1.xpose.msra.mxu0 0.0
    %157 = vmatprep.mubr.f32.mxu0 0.0
    %158 = vmatmul.mubr.f32.gmra.mrb[0].mxu0 %v43
    %v159 = vpop.f32.mrb[0].mxu0
    %v160 = vadd.f32 0.0, %v159
    %v161 = vpop.f32.mrb[0].mxu0
    %162 = vdwg.mxu0
    %v163 = vld [vmem:[%s2] sm:$0x1]
    %v164 = vld [vmem:[%s3] sm:$0xff]
    %v165 = vld [vmem:[%s4] sm:$0xff]
    %v166 = vld [vmem:[%s5] sm:$0xff]
    %v168 = vlaneseq
    %v169 = vshrl.u32 %v168, 7
    %v170 = vsub.s32 0, %v169
    %v171 = vrot.slane %v163, %v170
    %v173 = vmul.f32 %v160, %v171
    %v174 = vsub.f32 0.0, %v165
    %176 = vset.pattern.permute.xlu0 0
    %177 = vperm.xlu0 %176, %v174
    %v178 = vpop.permute.xlu0 %177
    %v180 = vmax.f32 %v173, %v178
    %182 = vset.pattern.permute.xlu0 0
    %183 = vperm.xlu0 %182, %v165
    %v184 = vpop.permute.xlu0 %183
    %v186 = vmin.f32 %v180, %v184
    %s187 = smul.u32 0, 128
    %v188 = vlaneseq
    %v189 = vand.u32 %v188, 127
    %v190 = vstv %s187
    %v191 = vadd.s32 %v190, %v189
    %192 = vset.pattern.permute.xlu0 0
    %193 = vperm.xlu0 %192, %v166
    %v194 = vpop.permute.xlu0 %193
    %vm195 = vcmp.eq.s32.totalorder %v191, %v194
    %v196 = vsel %vm195, %v173, 0.0
    %197 = vadd.xlane.f32.xlu0 %v196
    %v198 = vpop.xlane.xlu0 %197
    %v199 = vmul.f32 %v198, %v164
    %v200 = vmax.f32 %v199, -1.0
    %v201 = vmin.f32 %v200, 1.0
    %v202 = vmul.f32 %v201, %v201
    %v203 = vmul.f32 %v202, %v202
    %v204 = vmul.f32 %v203, 8.0
    %v205 = vmul.f32 %v202, 8.0
    %v206 = vsub.f32 %v204, %v205
    %v207 = vadd.f32 %v206, 1.0
    %vm208 = vcmp.le.f32.partialorder %v201, 0.70710677
    %v209 = vsel %vm208, 1.0, 0.0
    %v210 = vadd.f32 %v209, 0.0
    %v211 = vsel %vm208, -1.0, 1.0
    %vm212 = vcmp.le.f32.partialorder %v201, 1.7948966e-09
    %v213 = vsel %vm212, 1.0, 0.0
    %v214 = vadd.f32 %v210, %v213
    %v215 = vsub.f32 0.0, %v211
    %v216 = vsel %vm212, %v215, %v211
    %vm217 = vcmp.le.f32.partialorder %v201, -0.70710677
    %v218 = vsel %vm217, 1.0, 0.0
    %v219 = vadd.f32 %v214, %v218
    %v220 = vsub.f32 0.0, %v216
    %v221 = vsel %vm217, %v220, %v216
    %vm222 = vcmp.le.f32.partialorder %v201, -1.0
    %v223 = vsel %vm222, 1.0, 0.0
    %v224 = vadd.f32 %v219, %v223
    %v225 = vsub.f32 0.0, %v221
    %v226 = vsel %vm222, %v225, %v221
    %v227 = vmul.f32 %v226, %v207
    %v228 = vmul.f32 %v224, 2.0
    %v229 = vsub.f32 %v227, %v228
    %v230 = vsub.f32 %v229, %v201
    %v231 = vmul.f32 %v230, 0.001118747
    %v232 = vmul.f32 %v231, %v165
    %234 = vset.pattern.permute.xlu0 0
    %235 = vperm.xlu0 %234, %v232
    %v236 = vpop.permute.xlu0 %235
    %v238 = vsel %vm195, %v236, 0.0
    %v239 = vadd.f32 %v186, %v238
    %240 = vst [vmem:[#allocation2] sm:$0xff] %v239
    // Predicated region
    $region26: #{tpu_custom_call.1} parent=1 // pred_check
      _
    $region27: #{tpu_custom_call.1} parent=1 // pred_check_branch
      %242 = sbr.rel (0) target = $region29
    $region28: #{tpu_custom_call.1} parent=1 // pred_region
      %s244 = ssub.s32 128, 128
      %245 = vsyncadd [#allocation3], %s244
      %s247 = sshll.u32 [#allocation2], 4
      %s248 = int_to_ptr.vmem [resolvable:$true] %s247
      %250 = dma.vmem_to_hbm [thread:$0]  %s248, 128, %s6, [#allocation3]
    $region29: #{tpu_custom_call.1} parent=1 // pred_fallthru
      _
    // Predicated region
    $region30: #{tpu_custom_call.1} parent=1 // pred_check
      _
    $region31: #{tpu_custom_call.1} parent=1 // pred_check_branch
      %252 = sbr.rel (0) target = $region33
    $region32: #{tpu_custom_call.1} parent=1 // pred_region
      %253 = dma.done [#allocation3], 128
    $region33: #{tpu_custom_call.1} parent=1 // pred_fallthru
      _
    %254 = vsyncpa [#allocation3], 1

</llo_original>
